<compile_context>
chip_gen: v5e
topology: v5e:2x2
jax: 0.10.0
libtpu: 0.0.40
codegen_flags: <defaults>
</compile_context>

<pallas_src>
import functools

import jax
import jax.numpy as jnp
from jax.experimental import pallas as pl
from jax.experimental.pallas import tpu as pltpu


def _tree_sum(terms):
    """Pairwise (tree) accumulation to shorten the VALU dependency chain."""
    terms = list(terms)
    while len(terms) > 1:
        nxt = [terms[i] + terms[i + 1] for i in range(0, len(terms) - 1, 2)]
        if len(terms) % 2:
            nxt.append(terms[-1])
        terms = nxt
    return terms[0]


def _sepconv_block(x_ref, dw_ref, pw_ref, xpad_ref, *, Nb, Cin, K, dilation,
                   H, W, Wp, pad, Lout):
    """ReLU + depthwise KxK + pointwise 1x1 for Nb images (shared by both passes).

    x_ref:    (Nb, Cin, H*W)   unpadded images, channels on sublanes,
                               flattened spatial on lanes
    dw_ref:   (Nb*Cin, K*K)    depthwise weights, pre-tiled over the Nb images
    pw_ref:   (Cout, Cin)      pointwise weights
    xpad_ref: (Nb*Cin, Lpad)   VMEM scratch holding the zero-padded flat images
    Returns a list of Nb arrays of shape (Cout, Lout)."""
    # In-kernel zero padding: zero the scratch once, then ReLU-copy the H
    # valid rows of every image to their padded lane offsets (VMEM-local).
    xpad_ref[...] = jnp.zeros_like(xpad_ref)
    for b in range(Nb):
        xb = jnp.maximum(x_ref[b], 0.0)                       # ReLU, (Cin, H*W)
        for h in range(H):
            dst = (h + pad) * Wp + pad
            xpad_ref[b * Cin:(b + 1) * Cin, dst:dst + W] = xb[:, h * W:(h + 1) * W]
    xp = xpad_ref[...]                                        # (Nb*Cin, Lpad)
    dw = dw_ref[...]
    pw = pw_ref[...]

    # Depthwise conv: each tap is a static lane-offset slice of the flattened
    # padded image, scaled by its per-channel tap weight; tree-accumulated.
    taps = []
    for kh in range(K):
        for kw in range(K):
            off = kh * dilation * Wp + kw * dilation
            t = kh * K + kw
            taps.append(xp[:, off:off + Lout] * dw[:, t:t + 1])
    acc = _tree_sum(taps)                                     # (Nb*Cin, Lout)

    # Pointwise 1x1 conv as Cin broadcast-FMAs per image (VPU).
    # TODO(synk): for Cin/Cout >= ~32 flip layout and use jnp.dot on the MXU.
    ys = []
    for b in range(Nb):
        terms = [pw[:, ci:ci + 1] * acc[b * Cin + ci:b * Cin + ci + 1, :]
                 for ci in range(Cin)]
        ys.append(_tree_sum(terms))                           # (Cout, Lout)
    return ys


def _stats_kernel(x_ref, dw_ref, pw_ref, mask_ref, stat_ref, xpad_ref, *,
                  Nb, Cin, K, dilation, H, W, Wp, pad, Lout):
    """Pass 1 (stats-only): per-image per-channel [sum, sum-of-squares]."""
    ys = _sepconv_block(x_ref, dw_ref, pw_ref, xpad_ref, Nb=Nb, Cin=Cin, K=K,
                        dilation=dilation, H=H, W=W, Wp=Wp, pad=pad, Lout=Lout)
    m = mask_ref[...]                                         # (1, Lout)
    for b in range(Nb):
        ym = ys[b] * m                                        # junk cols zeroed
        s = jnp.sum(ym, axis=1, keepdims=True)                # (Cout, 1)
        q = jnp.sum(ym * ys[b], axis=1, keepdims=True)        # (Cout, 1)
        stat_ref[b] = jnp.concatenate([s, q], axis=1)         # one (Cout,2) store


def _apply_kernel(x_ref, dw_ref, pw_ref, scale_ref, shift_ref, o_ref, xpad_ref,
                  *, Nb, Cin, K, dilation, H, W, Wp, pad, Lout):
    """Pass 2: recompute the conv, apply folded BN, single lane-dense store."""
    ys = _sepconv_block(x_ref, dw_ref, pw_ref, xpad_ref, Nb=Nb, Cin=Cin, K=K,
                        dilation=dilation, H=H, W=W, Wp=Wp, pad=pad, Lout=Lout)
    scale = scale_ref[...]                                    # (Cout, 1)
    shift = shift_ref[...]                                    # (Cout, 1)
    for b in range(Nb):
        o_ref[b] = (ys[b] * scale + shift).astype(o_ref.dtype)


def sep_conv_forward(x_nchw, dw_w, pw_w, gamma, beta, *,
                     kernel_size=1, stride=1, padding=None, dilation=1,
                     eps=1e-5, images_per_block=None, out_dtype=jnp.float32):
    """Forward pass of SepConv.  PyTorch conventions:
       x_nchw: (N, C_in, H, W)
       dw_w:   (C_in, 1, K, K)      depthwise Conv2d weight (groups=C_in)
       pw_w:   (C_out, C_in, 1, 1)  pointwise Conv2d weight
       gamma, beta: (C_out,)        BatchNorm2d affine params
       Returns (N, C_out, Ho, Wo) in training-mode BN semantics."""
    if padding is None:
        padding = (kernel_size - 1) // 2
    assert stride == 1  # TODO(synk): stride > 1 not implemented in the kernel
    N, C_in, H, W = x_nchw.shape
    C_out = pw_w.shape[0]
    K = kernel_size
    Hp, Wp = H + 2 * padding, W + 2 * padding
    Ho = Hp - dilation * (K - 1)
    Wo = Wp - dilation * (K - 1)
    assert Ho > 0 and Wo > 0
    Lout = Ho * Wp                         # flat output incl. junk tail per row
    Lpad = Hp * Wp + dilation * (K - 1)    # flat padded input incl. tap overhang

    # Pack images per grid step so Nb*Cin fills the 8-sublane f32 vreg and the
    # per-step DMA / fixed overhead is amortized.
    if images_per_block is None:
        nb = min(N, max(1, 8 // max(C_in, 1)))
        while nb > 1 and N % nb != 0:
            nb -= 1
        images_per_block = nb
    Nb = images_per_block
    assert N % Nb == 0
    grid = (N // Nb,)

    # --- cheap glue: metadata reshape of x + tiny weight repacking ----------
    x_flat = x_nchw.astype(jnp.float32).reshape(N, C_in, H * W)
    dw = jnp.tile(dw_w[:, 0, :, :].reshape(C_in, K * K).astype(jnp.float32),
                  (Nb, 1))                                   # (Nb*Cin, K*K)
    pw = pw_w[:, :, 0, 0].astype(jnp.float32)                # (Cout, Cin)
    # Column q of the flattened output is a real output pixel iff q % Wp < Wo.
    mask = (jnp.arange(Lout, dtype=jnp.int32) % Wp < Wo)
    mask = mask.astype(jnp.float32).reshape(1, Lout)

    cparams = pltpu.CompilerParams(
        dimension_semantics=("parallel",),          # shard blocks across TCs
        vmem_limit_bytes=32 * 1024 * 1024)
    kargs = dict(Nb=Nb, Cin=C_in, K=K, dilation=dilation, H=H, W=W, Wp=Wp,
                 pad=padding, Lout=Lout)

    # ---- pass 1: stats only (no HBM write of the activation tensor) --------
    stats = pl.pallas_call(
        functools.partial(_stats_kernel, **kargs),
        out_shape=jax.ShapeDtypeStruct((N, C_out, 2), jnp.float32),
        grid=grid,
        in_specs=[
            pl.BlockSpec((Nb, C_in, H * W), lambda i: (i, 0, 0)),
            pl.BlockSpec((Nb * C_in, K * K), lambda i: (0, 0)),
            pl.BlockSpec((C_out, C_in), lambda i: (0, 0)),
            pl.BlockSpec((1, Lout), lambda i: (0, 0)),
        ],
        out_specs=pl.BlockSpec((Nb, C_out, 2), lambda i: (i, 0, 0)),
        scratch_shapes=[pltpu.VMEM((Nb * C_in, Lpad), jnp.float32)],
        compiler_params=cparams,
    )(x_flat, dw, pw, mask)

    # ---- tiny O(N*Cout) glue: finish batch stats, fold into scale/shift ----
    # (E[y^2]-E[y]^2 form in f32; adequate for conv-scale activations.)
    tot = jnp.sum(stats, axis=0)                             # (Cout, 2)
    count = jnp.float32(N * Ho * Wo)
    mean = tot[:, 0:1] / count
    var = tot[:, 1:2] / count - mean * mean                  # biased variance
    inv = jax.lax.rsqrt(var + eps)
    scale = gamma.reshape(C_out, 1).astype(jnp.float32) * inv
    shift = beta.reshape(C_out, 1).astype(jnp.float32) - mean * scale

    # ---- pass 2: recompute conv from x, apply folded BN, single store ------
    y_norm = pl.pallas_call(
        functools.partial(_apply_kernel, **kargs),
        out_shape=jax.ShapeDtypeStruct((N, C_out, Lout), out_dtype),
        grid=grid,
        in_specs=[
            pl.BlockSpec((Nb, C_in, H * W), lambda i: (i, 0, 0)),
            pl.BlockSpec((Nb * C_in, K * K), lambda i: (0, 0)),
            pl.BlockSpec((C_out, C_in), lambda i: (0, 0)),
            pl.BlockSpec((C_out, 1), lambda i: (0, 0)),
            pl.BlockSpec((C_out, 1), lambda i: (0, 0)),
        ],
        out_specs=pl.BlockSpec((Nb, C_out, Lout), lambda i: (i, 0, 0)),
        scratch_shapes=[pltpu.VMEM((Nb * C_in, Lpad), jnp.float32)],
        compiler_params=cparams,
    )(x_flat, dw, pw, scale, shift)

    # --- epilogue: free reshape + slice off the (K-1)*dilation junk cols/row -
    return y_norm.reshape(N, C_out, Ho, Wp)[:, :, :, :Wo]


def _reference_forward(x_nchw, dw_w, pw_w, gamma, beta,
                       *, kernel_size, padding, dilation, eps=1e-5):
    """Pure-JAX reference mirroring the PyTorch module (training-mode BN)."""
    C_in = x_nchw.shape[1]
    r = jnp.maximum(x_nchw, 0.0)
    z = jax.lax.conv_general_dilated(
        r, dw_w, window_strides=(1, 1),
        padding=[(padding, padding), (padding, padding)],
        rhs_dilation=(dilation, dilation),
        dimension_numbers=("NCHW", "OIHW", "NCHW"),
        feature_group_count=C_in)
    y = jax.lax.conv_general_dilated(
        z, pw_w, window_strides=(1, 1), padding="VALID",
        dimension_numbers=("NCHW", "OIHW", "NCHW"))
    mean = jnp.mean(y, axis=(0, 2, 3), keepdims=True)
    var = jnp.mean(jnp.square(y - mean), axis=(0, 2, 3), keepdims=True)
    y_hat = (y - mean) / jnp.sqrt(var + eps)
    return y_hat * gamma.reshape(1, -1, 1, 1) + beta.reshape(1, -1, 1, 1)


if __name__ == "__main__":
    # SepConv(C_in=4, C_out=8, kernel_size=3, stride=1) -> padding=1
    N, C_in, C_out, H, W = 2, 4, 8, 16, 16
    K, stride, padding, dilation = 3, 1, 1, 1

    key = jax.random.PRNGKey(0)
    kx, kdw, kpw, kg, kb = jax.random.split(key, 5)
    x = jax.random.normal(kx, (N, C_in, H, W), dtype=jnp.float32)
    dw_w = jax.random.normal(kdw, (C_in, 1, K, K), dtype=jnp.float32) * 0.3
    pw_w = jax.random.normal(kpw, (C_out, C_in, 1, 1), dtype=jnp.float32) * 0.3
    gamma = 1.0 + 0.1 * jax.random.normal(kg, (C_out,), dtype=jnp.float32)
    beta = 0.1 * jax.random.normal(kb, (C_out,), dtype=jnp.float32)

    out = sep_conv_forward(x, dw_w, pw_w, gamma, beta,
                           kernel_size=K, stride=stride,
                           padding=padding, dilation=dilation)
    out = jax.block_until_ready(out)

    ref = _reference_forward(x, dw_w, pw_w, gamma, beta,
                             kernel_size=K, padding=padding, dilation=dilation)
    assert out.shape == (N, C_out, H, W)
    err = float(jnp.max(jnp.abs(out - ref)))
    assert jnp.allclose(out, ref, rtol=1e-3, atol=3e-4), err

    print("KERNEL_OK")
</pallas_src>

<mosaic_0001>
module attributes {stable_mosaic.version = 11 : i64} {
  func.func @_stats_kernel(%arg0: i32, %arg1: memref<2x4x256xf32, #tpu.memory_space<vmem>>, %arg2: memref<8x9xf32, #tpu.memory_space<vmem>>, %arg3: memref<8x4xf32, #tpu.memory_space<vmem>>, %arg4: memref<1x288xf32, #tpu.memory_space<vmem>>, %arg5: memref<2x8x2xf32, #tpu.memory_space<vmem>>, %arg6: memref<8x326xf32, #tpu.memory_space<vmem>>) attributes {dimension_semantics = [#tpu.dimension_semantics<parallel>], iteration_bounds = array<i64: 1>, scalar_prefetch = 0 : i64, scratch_operands = 1 : i64, tpu.core_type = #tpu.core_type<tc>, window_params = [{transform_indices = @transform_0, window_bounds = array<i64: 2, 4, 256>}, {pipeline_mode = #tpu.pipeline_mode<synchronous>, transform_indices = @transform_1, window_bounds = array<i64: 8, 9>}, {pipeline_mode = #tpu.pipeline_mode<synchronous>, transform_indices = @transform_2, window_bounds = array<i64: 8, 4>}, {pipeline_mode = #tpu.pipeline_mode<synchronous>, transform_indices = @transform_3, window_bounds = array<i64: 1, 288>}, {transform_indices = @transform_4, window_bounds = array<i64: 2, 8, 2>}]} {
    %cst = arith.constant 0.000000e+00 : f32
    %0 = vector.broadcast %cst : f32 to vector<8x326xf32>
    %c0 = arith.constant 0 : index
    %c0_0 = arith.constant 0 : index
    %1 = vector.load %arg6[%c0, %c0_0] : memref<8x326xf32, #tpu.memory_space<vmem>>, vector<8x326xf32>
    tpu.vector_store %arg6[%c0, %c0_0], %0 {strides = array<i32>} : memref<8x326xf32, #tpu.memory_space<vmem>>, vector<8x326xf32>,
    %c0_1 = arith.constant 0 : index
    %c0_2 = arith.constant 0 : index
    %c0_3 = arith.constant 0 : index
    %2 = vector.load %arg1[%c0_1, %c0_2, %c0_3] : memref<2x4x256xf32, #tpu.memory_space<vmem>>, vector<1x4x256xf32>
    %3 = vector.shape_cast %2 : vector<1x4x256xf32> to vector<4x256xf32>
    %cst_4 = arith.constant 0.000000e+00 : f32
    %4 = vector.broadcast %cst_4 : f32 to vector<4x256xf32>
    %5 = arith.maximumf %3, %4 : vector<4x256xf32>
    %6 = vector.extract_strided_slice %5 {offsets = [0, 0], sizes = [4, 16], strides = [1, 1]} : vector<4x256xf32> to vector<4x16xf32>
    %c0_5 = arith.constant 0 : index
    %c19 = arith.constant 19 : index
    %7 = vector.load %arg6[%c0_5, %c19] : memref<8x326xf32, #tpu.memory_space<vmem>>, vector<4x16xf32>
    tpu.vector_store %arg6[%c0_5, %c19], %6 {strides = array<i32>} : memref<8x326xf32, #tpu.memory_space<vmem>>, vector<4x16xf32>,
    %8 = vector.extract_strided_slice %5 {offsets = [0, 16], sizes = [4, 16], strides = [1, 1]} : vector<4x256xf32> to vector<4x16xf32>
    %c0_6 = arith.constant 0 : index
    %c37 = arith.constant 37 : index
    %9 = vector.load %arg6[%c0_6, %c37] : memref<8x326xf32, #tpu.memory_space<vmem>>, vector<4x16xf32>
    tpu.vector_store %arg6[%c0_6, %c37], %8 {strides = array<i32>} : memref<8x326xf32, #tpu.memory_space<vmem>>, vector<4x16xf32>,
    %10 = vector.extract_strided_slice %5 {offsets = [0, 32], sizes = [4, 16], strides = [1, 1]} : vector<4x256xf32> to vector<4x16xf32>
    %c0_7 = arith.constant 0 : index
    %c55 = arith.constant 55 : index
    %11 = vector.load %arg6[%c0_7, %c55] : memref<8x326xf32, #tpu.memory_space<vmem>>, vector<4x16xf32>
    tpu.vector_store %arg6[%c0_7, %c55], %10 {strides = array<i32>} : memref<8x326xf32, #tpu.memory_space<vmem>>, vector<4x16xf32>,
    %12 = vector.extract_strided_slice %5 {offsets = [0, 48], sizes = [4, 16], strides = [1, 1]} : vector<4x256xf32> to vector<4x16xf32>
    %c0_8 = arith.constant 0 : index
    %c73 = arith.constant 73 : index
    %13 = vector.load %arg6[%c0_8, %c73] : memref<8x326xf32, #tpu.memory_space<vmem>>, vector<4x16xf32>
    tpu.vector_store %arg6[%c0_8, %c73], %12 {strides = array<i32>} : memref<8x326xf32, #tpu.memory_space<vmem>>, vector<4x16xf32>,
    %14 = vector.extract_strided_slice %5 {offsets = [0, 64], sizes = [4, 16], strides = [1, 1]} : vector<4x256xf32> to vector<4x16xf32>
    %c0_9 = arith.constant 0 : index
    %c91 = arith.constant 91 : index
    %15 = vector.load %arg6[%c0_9, %c91] : memref<8x326xf32, #tpu.memory_space<vmem>>, vector<4x16xf32>
    tpu.vector_store %arg6[%c0_9, %c91], %14 {strides = array<i32>} : memref<8x326xf32, #tpu.memory_space<vmem>>, vector<4x16xf32>,
    %16 = vector.extract_strided_slice %5 {offsets = [0, 80], sizes = [4, 16], strides = [1, 1]} : vector<4x256xf32> to vector<4x16xf32>
    %c0_10 = arith.constant 0 : index
    %c109 = arith.constant 109 : index
    %17 = vector.load %arg6[%c0_10, %c109] : memref<8x326xf32, #tpu.memory_space<vmem>>, vector<4x16xf32>
    tpu.vector_store %arg6[%c0_10, %c109], %16 {strides = array<i32>} : memref<8x326xf32, #tpu.memory_space<vmem>>, vector<4x16xf32>,
    %18 = vector.extract_strided_slice %5 {offsets = [0, 96], sizes = [4, 16], strides = [1, 1]} : vector<4x256xf32> to vector<4x16xf32>
    %c0_11 = arith.constant 0 : index
    %c127 = arith.constant 127 : index
    %19 = vector.load %arg6[%c0_11, %c127] : memref<8x326xf32, #tpu.memory_space<vmem>>, vector<4x16xf32>
    tpu.vector_store %arg6[%c0_11, %c127], %18 {strides = array<i32>} : memref<8x326xf32, #tpu.memory_space<vmem>>, vector<4x16xf32>,
    %20 = vector.extract_strided_slice %5 {offsets = [0, 112], sizes = [4, 16], strides = [1, 1]} : vector<4x256xf32> to vector<4x16xf32>
    %c0_12 = arith.constant 0 : index
    %c145 = arith.constant 145 : index
    %21 = vector.load %arg6[%c0_12, %c145] : memref<8x326xf32, #tpu.memory_space<vmem>>, vector<4x16xf32>
    tpu.vector_store %arg6[%c0_12, %c145], %20 {strides = array<i32>} : memref<8x326xf32, #tpu.memory_space<vmem>>, vector<4x16xf32>,
    %22 = vector.extract_strided_slice %5 {offsets = [0, 128], sizes = [4, 16], strides = [1, 1]} : vector<4x256xf32> to vector<4x16xf32>
    %c0_13 = arith.constant 0 : index
    %c163 = arith.constant 163 : index
    %23 = vector.load %arg6[%c0_13, %c163] : memref<8x326xf32, #tpu.memory_space<vmem>>, vector<4x16xf32>
    tpu.vector_store %arg6[%c0_13, %c163], %22 {strides = array<i32>} : memref<8x326xf32, #tpu.memory_space<vmem>>, vector<4x16xf32>,
    %24 = vector.extract_strided_slice %5 {offsets = [0, 144], sizes = [4, 16], strides = [1, 1]} : vector<4x256xf32> to vector<4x16xf32>
    %c0_14 = arith.constant 0 : index
    %c181 = arith.constant 181 : index
    %25 = vector.load %arg6[%c0_14, %c181] : memref<8x326xf32, #tpu.memory_space<vmem>>, vector<4x16xf32>
    tpu.vector_store %arg6[%c0_14, %c181], %24 {strides = array<i32>} : memref<8x326xf32, #tpu.memory_space<vmem>>, vector<4x16xf32>,
    %26 = vector.extract_strided_slice %5 {offsets = [0, 160], sizes = [4, 16], strides = [1, 1]} : vector<4x256xf32> to vector<4x16xf32>
    %c0_15 = arith.constant 0 : index
    %c199 = arith.constant 199 : index
    %27 = vector.load %arg6[%c0_15, %c199] : memref<8x326xf32, #tpu.memory_space<vmem>>, vector<4x16xf32>
    tpu.vector_store %arg6[%c0_15, %c199], %26 {strides = array<i32>} : memref<8x326xf32, #tpu.memory_space<vmem>>, vector<4x16xf32>,
    %28 = vector.extract_strided_slice %5 {offsets = [0, 176], sizes = [4, 16], strides = [1, 1]} : vector<4x256xf32> to vector<4x16xf32>
    %c0_16 = arith.constant 0 : index
    %c217 = arith.constant 217 : index
    %29 = vector.load %arg6[%c0_16, %c217] : memref<8x326xf32, #tpu.memory_space<vmem>>, vector<4x16xf32>
    tpu.vector_store %arg6[%c0_16, %c217], %28 {strides = array<i32>} : memref<8x326xf32, #tpu.memory_space<vmem>>, vector<4x16xf32>,
    %30 = vector.extract_strided_slice %5 {offsets = [0, 192], sizes = [4, 16], strides = [1, 1]} : vector<4x256xf32> to vector<4x16xf32>
    %c0_17 = arith.constant 0 : index
    %c235 = arith.constant 235 : index
    %31 = vector.load %arg6[%c0_17, %c235] : memref<8x326xf32, #tpu.memory_space<vmem>>, vector<4x16xf32>
    tpu.vector_store %arg6[%c0_17, %c235], %30 {strides = array<i32>} : memref<8x326xf32, #tpu.memory_space<vmem>>, vector<4x16xf32>,
    %32 = vector.extract_strided_slice %5 {offsets = [0, 208], sizes = [4, 16], strides = [1, 1]} : vector<4x256xf32> to vector<4x16xf32>
    %c0_18 = arith.constant 0 : index
    %c253 = arith.constant 253 : index
    %33 = vector.load %arg6[%c0_18, %c253] : memref<8x326xf32, #tpu.memory_space<vmem>>, vector<4x16xf32>
    tpu.vector_store %arg6[%c0_18, %c253], %32 {strides = array<i32>} : memref<8x326xf32, #tpu.memory_space<vmem>>, vector<4x16xf32>,
    %34 = vector.extract_strided_slice %5 {offsets = [0, 224], sizes = [4, 16], strides = [1, 1]} : vector<4x256xf32> to vector<4x16xf32>
    %c0_19 = arith.constant 0 : index
    %c271 = arith.constant 271 : index
    %35 = vector.load %arg6[%c0_19, %c271] : memref<8x326xf32, #tpu.memory_space<vmem>>, vector<4x16xf32>
    tpu.vector_store %arg6[%c0_19, %c271], %34 {strides = array<i32>} : memref<8x326xf32, #tpu.memory_space<vmem>>, vector<4x16xf32>,
    %36 = vector.extract_strided_slice %5 {offsets = [0, 240], sizes = [4, 16], strides = [1, 1]} : vector<4x256xf32> to vector<4x16xf32>
    %c0_20 = arith.constant 0 : index
    %c289 = arith.constant 289 : index
    %37 = vector.load %arg6[%c0_20, %c289] : memref<8x326xf32, #tpu.memory_space<vmem>>, vector<4x16xf32>
    tpu.vector_store %arg6[%c0_20, %c289], %36 {strides = array<i32>} : memref<8x326xf32, #tpu.memory_space<vmem>>, vector<4x16xf32>,
    %c1 = arith.constant 1 : index
    %c0_21 = arith.constant 0 : index
    %c0_22 = arith.constant 0 : index
    %38 = vector.load %arg1[%c1, %c0_21, %c0_22] : memref<2x4x256xf32, #tpu.memory_space<vmem>>, vector<1x4x256xf32>
    %39 = vector.shape_cast %38 : vector<1x4x256xf32> to vector<4x256xf32>
    %cst_23 = arith.constant 0.000000e+00 : f32
    %40 = vector.broadcast %cst_23 : f32 to vector<4x256xf32>
    %41 = arith.maximumf %39, %40 : vector<4x256xf32>
    %42 = vector.extract_strided_slice %41 {offsets = [0, 0], sizes = [4, 16], strides = [1, 1]} : vector<4x256xf32> to vector<4x16xf32>
    %c4 = arith.constant 4 : index
    %c19_24 = arith.constant 19 : index
    %43 = vector.load %arg6[%c4, %c19_24] : memref<8x326xf32, #tpu.memory_space<vmem>>, vector<4x16xf32>
    tpu.vector_store %arg6[%c4, %c19_24], %42 {strides = array<i32>} : memref<8x326xf32, #tpu.memory_space<vmem>>, vector<4x16xf32>,
    %44 = vector.extract_strided_slice %41 {offsets = [0, 16], sizes = [4, 16], strides = [1, 1]} : vector<4x256xf32> to vector<4x16xf32>
    %c4_25 = arith.constant 4 : index
    %c37_26 = arith.constant 37 : index
    %45 = vector.load %arg6[%c4_25, %c37_26] : memref<8x326xf32, #tpu.memory_space<vmem>>, vector<4x16xf32>
    tpu.vector_store %arg6[%c4_25, %c37_26], %44 {strides = array<i32>} : memref<8x326xf32, #tpu.memory_space<vmem>>, vector<4x16xf32>,
    %46 = vector.extract_strided_slice %41 {offsets = [0, 32], sizes = [4, 16], strides = [1, 1]} : vector<4x256xf32> to vector<4x16xf32>
    %c4_27 = arith.constant 4 : index
    %c55_28 = arith.constant 55 : index
    %47 = vector.load %arg6[%c4_27, %c55_28] : memref<8x326xf32, #tpu.memory_space<vmem>>, vector<4x16xf32>
    tpu.vector_store %arg6[%c4_27, %c55_28], %46 {strides = array<i32>} : memref<8x326xf32, #tpu.memory_space<vmem>>, vector<4x16xf32>,
    %48 = vector.extract_strided_slice %41 {offsets = [0, 48], sizes = [4, 16], strides = [1, 1]} : vector<4x256xf32> to vector<4x16xf32>
    %c4_29 = arith.constant 4 : index
    %c73_30 = arith.constant 73 : index
    %49 = vector.load %arg6[%c4_29, %c73_30] : memref<8x326xf32, #tpu.memory_space<vmem>>, vector<4x16xf32>
    tpu.vector_store %arg6[%c4_29, %c73_30], %48 {strides = array<i32>} : memref<8x326xf32, #tpu.memory_space<vmem>>, vector<4x16xf32>,
    %50 = vector.extract_strided_slice %41 {offsets = [0, 64], sizes = [4, 16], strides = [1, 1]} : vector<4x256xf32> to vector<4x16xf32>
    %c4_31 = arith.constant 4 : index
    %c91_32 = arith.constant 91 : index
    %51 = vector.load %arg6[%c4_31, %c91_32] : memref<8x326xf32, #tpu.memory_space<vmem>>, vector<4x16xf32>
    tpu.vector_store %arg6[%c4_31, %c91_32], %50 {strides = array<i32>} : memref<8x326xf32, #tpu.memory_space<vmem>>, vector<4x16xf32>,
    %52 = vector.extract_strided_slice %41 {offsets = [0, 80], sizes = [4, 16], strides = [1, 1]} : vector<4x256xf32> to vector<4x16xf32>
    %c4_33 = arith.constant 4 : index
    %c109_34 = arith.constant 109 : index
    %53 = vector.load %arg6[%c4_33, %c109_34] : memref<8x326xf32, #tpu.memory_space<vmem>>, vector<4x16xf32>
    tpu.vector_store %arg6[%c4_33, %c109_34], %52 {strides = array<i32>} : memref<8x326xf32, #tpu.memory_space<vmem>>, vector<4x16xf32>,
    %54 = vector.extract_strided_slice %41 {offsets = [0, 96], sizes = [4, 16], strides = [1, 1]} : vector<4x256xf32> to vector<4x16xf32>
    %c4_35 = arith.constant 4 : index
    %c127_36 = arith.constant 127 : index
    %55 = vector.load %arg6[%c4_35, %c127_36] : memref<8x326xf32, #tpu.memory_space<vmem>>, vector<4x16xf32>
    tpu.vector_store %arg6[%c4_35, %c127_36], %54 {strides = array<i32>} : memref<8x326xf32, #tpu.memory_space<vmem>>, vector<4x16xf32>,
    %56 = vector.extract_strided_slice %41 {offsets = [0, 112], sizes = [4, 16], strides = [1, 1]} : vector<4x256xf32> to vector<4x16xf32>
    %c4_37 = arith.constant 4 : index
    %c145_38 = arith.constant 145 : index
    %57 = vector.load %arg6[%c4_37, %c145_38] : memref<8x326xf32, #tpu.memory_space<vmem>>, vector<4x16xf32>
    tpu.vector_store %arg6[%c4_37, %c145_38], %56 {strides = array<i32>} : memref<8x326xf32, #tpu.memory_space<vmem>>, vector<4x16xf32>,
    %58 = vector.extract_strided_slice %41 {offsets = [0, 128], sizes = [4, 16], strides = [1, 1]} : vector<4x256xf32> to vector<4x16xf32>
    %c4_39 = arith.constant 4 : index
    %c163_40 = arith.constant 163 : index
    %59 = vector.load %arg6[%c4_39, %c163_40] : memref<8x326xf32, #tpu.memory_space<vmem>>, vector<4x16xf32>
    tpu.vector_store %arg6[%c4_39, %c163_40], %58 {strides = array<i32>} : memref<8x326xf32, #tpu.memory_space<vmem>>, vector<4x16xf32>,
    %60 = vector.extract_strided_slice %41 {offsets = [0, 144], sizes = [4, 16], strides = [1, 1]} : vector<4x256xf32> to vector<4x16xf32>
    %c4_41 = arith.constant 4 : index
    %c181_42 = arith.constant 181 : index
    %61 = vector.load %arg6[%c4_41, %c181_42] : memref<8x326xf32, #tpu.memory_space<vmem>>, vector<4x16xf32>
    tpu.vector_store %arg6[%c4_41, %c181_42], %60 {strides = array<i32>} : memref<8x326xf32, #tpu.memory_space<vmem>>, vector<4x16xf32>,
    %62 = vector.extract_strided_slice %41 {offsets = [0, 160], sizes = [4, 16], strides = [1, 1]} : vector<4x256xf32> to vector<4x16xf32>
    %c4_43 = arith.constant 4 : index
    %c199_44 = arith.constant 199 : index
    %63 = vector.load %arg6[%c4_43, %c199_44] : memref<8x326xf32, #tpu.memory_space<vmem>>, vector<4x16xf32>
    tpu.vector_store %arg6[%c4_43, %c199_44], %62 {strides = array<i32>} : memref<8x326xf32, #tpu.memory_space<vmem>>, vector<4x16xf32>,
    %64 = vector.extract_strided_slice %41 {offsets = [0, 176], sizes = [4, 16], strides = [1, 1]} : vector<4x256xf32> to vector<4x16xf32>
    %c4_45 = arith.constant 4 : index
    %c217_46 = arith.constant 217 : index
    %65 = vector.load %arg6[%c4_45, %c217_46] : memref<8x326xf32, #tpu.memory_space<vmem>>, vector<4x16xf32>
    tpu.vector_store %arg6[%c4_45, %c217_46], %64 {strides = array<i32>} : memref<8x326xf32, #tpu.memory_space<vmem>>, vector<4x16xf32>,
    %66 = vector.extract_strided_slice %41 {offsets = [0, 192], sizes = [4, 16], strides = [1, 1]} : vector<4x256xf32> to vector<4x16xf32>
    %c4_47 = arith.constant 4 : index
    %c235_48 = arith.constant 235 : index
    %67 = vector.load %arg6[%c4_47, %c235_48] : memref<8x326xf32, #tpu.memory_space<vmem>>, vector<4x16xf32>
    tpu.vector_store %arg6[%c4_47, %c235_48], %66 {strides = array<i32>} : memref<8x326xf32, #tpu.memory_space<vmem>>, vector<4x16xf32>,
    %68 = vector.extract_strided_slice %41 {offsets = [0, 208], sizes = [4, 16], strides = [1, 1]} : vector<4x256xf32> to vector<4x16xf32>
    %c4_49 = arith.constant 4 : index
    %c253_50 = arith.constant 253 : index
    %69 = vector.load %arg6[%c4_49, %c253_50] : memref<8x326xf32, #tpu.memory_space<vmem>>, vector<4x16xf32>
    tpu.vector_store %arg6[%c4_49, %c253_50], %68 {strides = array<i32>} : memref<8x326xf32, #tpu.memory_space<vmem>>, vector<4x16xf32>,
    %70 = vector.extract_strided_slice %41 {offsets = [0, 224], sizes = [4, 16], strides = [1, 1]} : vector<4x256xf32> to vector<4x16xf32>
    %c4_51 = arith.constant 4 : index
    %c271_52 = arith.constant 271 : index
    %71 = vector.load %arg6[%c4_51, %c271_52] : memref<8x326xf32, #tpu.memory_space<vmem>>, vector<4x16xf32>
    tpu.vector_store %arg6[%c4_51, %c271_52], %70 {strides = array<i32>} : memref<8x326xf32, #tpu.memory_space<vmem>>, vector<4x16xf32>,
    %72 = vector.extract_strided_slice %41 {offsets = [0, 240], sizes = [4, 16], strides = [1, 1]} : vector<4x256xf32> to vector<4x16xf32>
    %c4_53 = arith.constant 4 : index
    %c289_54 = arith.constant 289 : index
    %73 = vector.load %arg6[%c4_53, %c289_54] : memref<8x326xf32, #tpu.memory_space<vmem>>, vector<4x16xf32>
    tpu.vector_store %arg6[%c4_53, %c289_54], %72 {strides = array<i32>} : memref<8x326xf32, #tpu.memory_space<vmem>>, vector<4x16xf32>,
    %c0_55 = arith.constant 0 : index
    %c0_56 = arith.constant 0 : index
    %74 = vector.load %arg6[%c0_55, %c0_56] : memref<8x326xf32, #tpu.memory_space<vmem>>, vector<8x326xf32>
    %c0_57 = arith.constant 0 : index
    %c0_58 = arith.constant 0 : index
    %75 = vector.load %arg2[%c0_57, %c0_58] : memref<8x9xf32, #tpu.memory_space<vmem>>, vector<8x9xf32>
    %c0_59 = arith.constant 0 : index
    %c0_60 = arith.constant 0 : index
    %76 = vector.load %arg3[%c0_59, %c0_60] : memref<8x4xf32, #tpu.memory_space<vmem>>, vector<8x4xf32>
    %77 = vector.extract_strided_slice %74 {offsets = [0, 0], sizes = [8, 288], strides = [1, 1]} : vector<8x326xf32> to vector<8x288xf32>
    %78 = vector.extract_strided_slice %75 {offsets = [0, 0], sizes = [8, 1], strides = [1, 1]} : vector<8x9xf32> to vector<8x1xf32>
    %79 = vector.broadcast %78 : vector<8x1xf32> to vector<8x288xf32>
    %80 = arith.mulf %77, %79 : vector<8x288xf32>
    %81 = vector.extract_strided_slice %74 {offsets = [0, 1], sizes = [8, 288], strides = [1, 1]} : vector<8x326xf32> to vector<8x288xf32>
    %82 = vector.extract_strided_slice %75 {offsets = [0, 1], sizes = [8, 1], strides = [1, 1]} : vector<8x9xf32> to vector<8x1xf32>
    %83 = vector.broadcast %82 : vector<8x1xf32> to vector<8x288xf32>
    %84 = arith.mulf %81, %83 : vector<8x288xf32>
    %85 = vector.extract_strided_slice %74 {offsets = [0, 2], sizes = [8, 288], strides = [1, 1]} : vector<8x326xf32> to vector<8x288xf32>
    %86 = vector.extract_strided_slice %75 {offsets = [0, 2], sizes = [8, 1], strides = [1, 1]} : vector<8x9xf32> to vector<8x1xf32>
    %87 = vector.broadcast %86 : vector<8x1xf32> to vector<8x288xf32>
    %88 = arith.mulf %85, %87 : vector<8x288xf32>
    %89 = vector.extract_strided_slice %74 {offsets = [0, 18], sizes = [8, 288], strides = [1, 1]} : vector<8x326xf32> to vector<8x288xf32>
    %90 = vector.extract_strided_slice %75 {offsets = [0, 3], sizes = [8, 1], strides = [1, 1]} : vector<8x9xf32> to vector<8x1xf32>
    %91 = vector.broadcast %90 : vector<8x1xf32> to vector<8x288xf32>
    %92 = arith.mulf %89, %91 : vector<8x288xf32>
    %93 = vector.extract_strided_slice %74 {offsets = [0, 19], sizes = [8, 288], strides = [1, 1]} : vector<8x326xf32> to vector<8x288xf32>
    %94 = vector.extract_strided_slice %75 {offsets = [0, 4], sizes = [8, 1], strides = [1, 1]} : vector<8x9xf32> to vector<8x1xf32>
    %95 = vector.broadcast %94 : vector<8x1xf32> to vector<8x288xf32>
    %96 = arith.mulf %93, %95 : vector<8x288xf32>
    %97 = vector.extract_strided_slice %74 {offsets = [0, 20], sizes = [8, 288], strides = [1, 1]} : vector<8x326xf32> to vector<8x288xf32>
    %98 = vector.extract_strided_slice %75 {offsets = [0, 5], sizes = [8, 1], strides = [1, 1]} : vector<8x9xf32> to vector<8x1xf32>
    %99 = vector.broadcast %98 : vector<8x1xf32> to vector<8x288xf32>
    %100 = arith.mulf %97, %99 : vector<8x288xf32>
    %101 = vector.extract_strided_slice %74 {offsets = [0, 36], sizes = [8, 288], strides = [1, 1]} : vector<8x326xf32> to vector<8x288xf32>
    %102 = vector.extract_strided_slice %75 {offsets = [0, 6], sizes = [8, 1], strides = [1, 1]} : vector<8x9xf32> to vector<8x1xf32>
    %103 = vector.broadcast %102 : vector<8x1xf32> to vector<8x288xf32>
    %104 = arith.mulf %101, %103 : vector<8x288xf32>
    %105 = vector.extract_strided_slice %74 {offsets = [0, 37], sizes = [8, 288], strides = [1, 1]} : vector<8x326xf32> to vector<8x288xf32>
    %106 = vector.extract_strided_slice %75 {offsets = [0, 7], sizes = [8, 1], strides = [1, 1]} : vector<8x9xf32> to vector<8x1xf32>
    %107 = vector.broadcast %106 : vector<8x1xf32> to vector<8x288xf32>
    %108 = arith.mulf %105, %107 : vector<8x288xf32>
    %109 = vector.extract_strided_slice %74 {offsets = [0, 38], sizes = [8, 288], strides = [1, 1]} : vector<8x326xf32> to vector<8x288xf32>
    %110 = vector.extract_strided_slice %75 {offsets = [0, 8], sizes = [8, 1], strides = [1, 1]} : vector<8x9xf32> to vector<8x1xf32>
    %111 = vector.broadcast %110 : vector<8x1xf32> to vector<8x288xf32>
    %112 = arith.mulf %109, %111 : vector<8x288xf32>
    %113 = arith.addf %80, %84 : vector<8x288xf32>
    %114 = arith.addf %88, %92 : vector<8x288xf32>
    %115 = arith.addf %96, %100 : vector<8x288xf32>
    %116 = arith.addf %104, %108 : vector<8x288xf32>
    %117 = arith.addf %113, %114 : vector<8x288xf32>
    %118 = arith.addf %115, %116 : vector<8x288xf32>
    %119 = arith.addf %117, %118 : vector<8x288xf32>
    %120 = arith.addf %119, %112 : vector<8x288xf32>
    %121 = vector.extract_strided_slice %76 {offsets = [0, 0], sizes = [8, 1], strides = [1, 1]} : vector<8x4xf32> to vector<8x1xf32>
    %122 = vector.extract_strided_slice %120 {offsets = [0, 0], sizes = [1, 288], strides = [1, 1]} : vector<8x288xf32> to vector<1x288xf32>
    %123 = vector.broadcast %121 : vector<8x1xf32> to vector<8x288xf32>
    %124 = vector.broadcast %122 : vector<1x288xf32> to vector<8x288xf32>
    %125 = arith.mulf %123, %124 : vector<8x288xf32>
    %126 = vector.extract_strided_slice %76 {offsets = [0, 1], sizes = [8, 1], strides = [1, 1]} : vector<8x4xf32> to vector<8x1xf32>
    %127 = vector.extract_strided_slice %120 {offsets = [1, 0], sizes = [1, 288], strides = [1, 1]} : vector<8x288xf32> to vector<1x288xf32>
    %128 = vector.broadcast %126 : vector<8x1xf32> to vector<8x288xf32>
    %129 = vector.broadcast %127 : vector<1x288xf32> to vector<8x288xf32>
    %130 = arith.mulf %128, %129 : vector<8x288xf32>
    %131 = vector.extract_strided_slice %76 {offsets = [0, 2], sizes = [8, 1], strides = [1, 1]} : vector<8x4xf32> to vector<8x1xf32>
    %132 = vector.extract_strided_slice %120 {offsets = [2, 0], sizes = [1, 288], strides = [1, 1]} : vector<8x288xf32> to vector<1x288xf32>
    %133 = vector.broadcast %131 : vector<8x1xf32> to vector<8x288xf32>
    %134 = vector.broadcast %132 : vector<1x288xf32> to vector<8x288xf32>
    %135 = arith.mulf %133, %134 : vector<8x288xf32>
    %136 = vector.extract_strided_slice %76 {offsets = [0, 3], sizes = [8, 1], strides = [1, 1]} : vector<8x4xf32> to vector<8x1xf32>
    %137 = vector.extract_strided_slice %120 {offsets = [3, 0], sizes = [1, 288], strides = [1, 1]} : vector<8x288xf32> to vector<1x288xf32>
    %138 = vector.broadcast %136 : vector<8x1xf32> to vector<8x288xf32>
    %139 = vector.broadcast %137 : vector<1x288xf32> to vector<8x288xf32>
    %140 = arith.mulf %138, %139 : vector<8x288xf32>
    %141 = arith.addf %125, %130 : vector<8x288xf32>
    %142 = arith.addf %135, %140 : vector<8x288xf32>
    %143 = arith.addf %141, %142 : vector<8x288xf32>
    %144 = vector.extract_strided_slice %76 {offsets = [0, 0], sizes = [8, 1], strides = [1, 1]} : vector<8x4xf32> to vector<8x1xf32>
    %145 = vector.extract_strided_slice %120 {offsets = [4, 0], sizes = [1, 288], strides = [1, 1]} : vector<8x288xf32> to vector<1x288xf32>
    %146 = vector.broadcast %144 : vector<8x1xf32> to vector<8x288xf32>
    %147 = vector.broadcast %145 : vector<1x288xf32> to vector<8x288xf32>
    %148 = arith.mulf %146, %147 : vector<8x288xf32>
    %149 = vector.extract_strided_slice %76 {offsets = [0, 1], sizes = [8, 1], strides = [1, 1]} : vector<8x4xf32> to vector<8x1xf32>
    %150 = vector.extract_strided_slice %120 {offsets = [5, 0], sizes = [1, 288], strides = [1, 1]} : vector<8x288xf32> to vector<1x288xf32>
    %151 = vector.broadcast %149 : vector<8x1xf32> to vector<8x288xf32>
    %152 = vector.broadcast %150 : vector<1x288xf32> to vector<8x288xf32>
    %153 = arith.mulf %151, %152 : vector<8x288xf32>
    %154 = vector.extract_strided_slice %76 {offsets = [0, 2], sizes = [8, 1], strides = [1, 1]} : vector<8x4xf32> to vector<8x1xf32>
    %155 = vector.extract_strided_slice %120 {offsets = [6, 0], sizes = [1, 288], strides = [1, 1]} : vector<8x288xf32> to vector<1x288xf32>
    %156 = vector.broadcast %154 : vector<8x1xf32> to vector<8x288xf32>
    %157 = vector.broadcast %155 : vector<1x288xf32> to vector<8x288xf32>
    %158 = arith.mulf %156, %157 : vector<8x288xf32>
    %159 = vector.extract_strided_slice %76 {offsets = [0, 3], sizes = [8, 1], strides = [1, 1]} : vector<8x4xf32> to vector<8x1xf32>
    %160 = vector.extract_strided_slice %120 {offsets = [7, 0], sizes = [1, 288], strides = [1, 1]} : vector<8x288xf32> to vector<1x288xf32>
    %161 = vector.broadcast %159 : vector<8x1xf32> to vector<8x288xf32>
    %162 = vector.broadcast %160 : vector<1x288xf32> to vector<8x288xf32>
    %163 = arith.mulf %161, %162 : vector<8x288xf32>
    %164 = arith.addf %148, %153 : vector<8x288xf32>
    %165 = arith.addf %158, %163 : vector<8x288xf32>
    %166 = arith.addf %164, %165 : vector<8x288xf32>
    %c0_61 = arith.constant 0 : index
    %c0_62 = arith.constant 0 : index
    %167 = vector.load %arg4[%c0_61, %c0_62] : memref<1x288xf32, #tpu.memory_space<vmem>>, vector<1x288xf32>
    %168 = vector.broadcast %167 : vector<1x288xf32> to vector<8x288xf32>
    %169 = arith.mulf %143, %168 : vector<8x288xf32>
    %cst_63 = arith.constant dense<0.000000e+00> : vector<8xf32>
    %170 = vector.multi_reduction <add>, %169, %cst_63 [1] : vector<8x288xf32> to vector<8xf32>
    %171 = vector.shape_cast %170 : vector<8xf32> to vector<8x1xf32>
    %172 = arith.mulf %169, %143 : vector<8x288xf32>
    %cst_64 = arith.constant dense<0.000000e+00> : vector<8xf32>
    %173 = vector.multi_reduction <add>, %172, %cst_64 [1] : vector<8x288xf32> to vector<8xf32>
    %174 = vector.shape_cast %173 : vector<8xf32> to vector<8x1xf32>
    %175 = tpu.concatenate %171, %174 in 1 : vector<8x1xf32>, vector<8x1xf32> -> vector<8x2xf32>
    %c0_65 = arith.constant 0 : index
    %c0_66 = arith.constant 0 : index
    %c0_67 = arith.constant 0 : index
    %176 = vector.load %arg5[%c0_65, %c0_66, %c0_67] : memref<2x8x2xf32, #tpu.memory_space<vmem>>, vector<1x8x2xf32>
    %177 = vector.shape_cast %176 : vector<1x8x2xf32> to vector<8x2xf32>
    %178 = vector.shape_cast %175 : vector<8x2xf32> to vector<1x8x2xf32>
    tpu.vector_store %arg5[%c0_65, %c0_66, %c0_67], %178 {strides = array<i32>} : memref<2x8x2xf32, #tpu.memory_space<vmem>>, vector<1x8x2xf32>,
    %179 = vector.broadcast %167 : vector<1x288xf32> to vector<8x288xf32>
    %180 = arith.mulf %166, %179 : vector<8x288xf32>
    %cst_68 = arith.constant dense<0.000000e+00> : vector<8xf32>
    %181 = vector.multi_reduction <add>, %180, %cst_68 [1] : vector<8x288xf32> to vector<8xf32>
    %182 = vector.shape_cast %181 : vector<8xf32> to vector<8x1xf32>
    %183 = arith.mulf %180, %166 : vector<8x288xf32>
    %cst_69 = arith.constant dense<0.000000e+00> : vector<8xf32>
    %184 = vector.multi_reduction <add>, %183, %cst_69 [1] : vector<8x288xf32> to vector<8xf32>
    %185 = vector.shape_cast %184 : vector<8xf32> to vector<8x1xf32>
    %186 = tpu.concatenate %182, %185 in 1 : vector<8x1xf32>, vector<8x1xf32> -> vector<8x2xf32>
    %c1_70 = arith.constant 1 : index
    %c0_71 = arith.constant 0 : index
    %c0_72 = arith.constant 0 : index
    %187 = vector.load %arg5[%c1_70, %c0_71, %c0_72] : memref<2x8x2xf32, #tpu.memory_space<vmem>>, vector<1x8x2xf32>
    %188 = vector.shape_cast %187 : vector<1x8x2xf32> to vector<8x2xf32>
    %189 = vector.shape_cast %186 : vector<8x2xf32> to vector<1x8x2xf32>
    tpu.vector_store %arg5[%c1_70, %c0_71, %c0_72], %189 {strides = array<i32>} : memref<2x8x2xf32, #tpu.memory_space<vmem>>, vector<1x8x2xf32>,
    return
  }
  func.func @transform_0(%arg0: i32) -> (i32, i32, i32) {
    %c0_i32 = arith.constant 0 : i32
    %c0_i32_0 = arith.constant 0 : i32
    %c0_i32_1 = arith.constant 0 : i32
    return %arg0, %c0_i32, %c0_i32_0 : i32, i32, i32
  }
  func.func @transform_1(%arg0: i32) -> (i32, i32) {
    %c0_i32 = arith.constant 0 : i32
    %c0_i32_0 = arith.constant 0 : i32
    %c0_i32_1 = arith.constant 0 : i32
    return %c0_i32, %c0_i32_0 : i32, i32
  }
  func.func @transform_2(%arg0: i32) -> (i32, i32) {
    %c0_i32 = arith.constant 0 : i32
    %c0_i32_0 = arith.constant 0 : i32
    %c0_i32_1 = arith.constant 0 : i32
    return %c0_i32, %c0_i32_0 : i32, i32
  }
  func.func @transform_3(%arg0: i32) -> (i32, i32) {
    %c0_i32 = arith.constant 0 : i32
    %c0_i32_0 = arith.constant 0 : i32
    %c0_i32_1 = arith.constant 0 : i32
    return %c0_i32, %c0_i32_0 : i32, i32
  }
  func.func @transform_4(%arg0: i32) -> (i32, i32, i32) {
    %c0_i32 = arith.constant 0 : i32
    %c0_i32_0 = arith.constant 0 : i32
    %c0_i32_1 = arith.constant 0 : i32
    return %arg0, %c0_i32, %c0_i32_0 : i32, i32, i32
  }
}

</mosaic_0001>

<llo_original>
// kernel: tpu_custom_call.1
$region0: #{tpu_custom_call.1}
  #allocation0 [shape = 'u32[]', space=smem, size = 0x4, offset = 0x4, fixed_abs, tag = 'smem constant byte address 0x4 - core index']
  #allocation1 [shape = 'u32[72,128]{1,0:T(1,128)}', space=vmem, size = 0x9000, scoped, tag = 'internal scratch']
  #allocation2 [shape = 'f32[8,326]{1,0:T(8,128)}', space=vmem, size = 0x3000, scoped, tag = 'scratch operand']
  %s0 = inlined_call_operand.hbm [shape: f32[2,4,256], index: 0, kind: input, shape index: {}]
  %s1 = inlined_call_operand.vmem [shape: f32[8,9], index: 1, kind: input, shape index: {}]
  %s2 = inlined_call_operand.vmem [shape: f32[8,4], index: 2, kind: input, shape index: {}]
  %s3 = inlined_call_operand.vmem [shape: f32[1,288], index: 3, kind: input, shape index: {}]
  %s4 = inlined_call_operand.vmem [shape: f32[2,8,2], index: 4, kind: output, shape index: {}]
  %s5 = sld [smem:[#allocation0]]
  $region30: #{tpu_custom_call.1} parent=0
    _
  %s7 = ssub.s32 1, %s5
  %s8 = scalar_select 0, %s7, %s5
  $region1: #{tpu_custom_call.1} parent=0
    #allocation3 [shape = 'u8[8192]{0}', space=vmem, size = 0x2000, scoped, tag = 'input window, operand 0, single buffered']
    #allocation4 [shape = 's32[1]{0}', space=sflag, size = 0x4, scoped, tag = 'scoped memory for tpu_custom_call.1']
    %9 = vsyncpa [#allocation4], 0
    // Predicated region
    $region2: #{tpu_custom_call.1} parent=1 // pred_check
      _
    $region3: #{tpu_custom_call.1} parent=1 // pred_check_branch
      %11 = sbr.rel (0) target = $region5
    $region4: #{tpu_custom_call.1} parent=1 // pred_region
      %13 = vsyncadd [#allocation4], 0
      %s14 = sshll.u32 %s0, 4
      %s15 = int_to_ptr.hbm [resolvable:$true] %s14
      %s16 = sshll.u32 [#allocation3], 4
      %s17 = int_to_ptr.vmem [resolvable:$true] %s16
      %22 = dma.hbm_to_vmem [thread:$0]  %s15, 256, %s17, [#allocation4], 128, 128, 8
    $region5: #{tpu_custom_call.1} parent=1 // pred_fallthru
      _
    // Predicated region
    $region6: #{tpu_custom_call.1} parent=1 // pred_check
      _
    $region7: #{tpu_custom_call.1} parent=1 // pred_check_branch
      %24 = sbr.rel (0) target = $region9
    $region8: #{tpu_custom_call.1} parent=1 // pred_region
      _
    $region9: #{tpu_custom_call.1} parent=1 // pred_fallthru
      _
    // Predicated region
    $region10: #{tpu_custom_call.1} parent=1 // pred_check
      _
    $region11: #{tpu_custom_call.1} parent=1 // pred_check_branch
      %26 = sbr.rel (0) target = $region13
    $region12: #{tpu_custom_call.1} parent=1 // pred_region
      _
    $region13: #{tpu_custom_call.1} parent=1 // pred_fallthru
      _
    // Predicated region
    $region14: #{tpu_custom_call.1} parent=1 // pred_check
      _
    $region15: #{tpu_custom_call.1} parent=1 // pred_check_branch
      %28 = sbr.rel (0) target = $region17
    $region16: #{tpu_custom_call.1} parent=1 // pred_region
      _
    $region17: #{tpu_custom_call.1} parent=1 // pred_fallthru
      _
    // Predicated region
    $region18: #{tpu_custom_call.1} parent=1 // pred_check
      _
    $region19: #{tpu_custom_call.1} parent=1 // pred_check_branch
      %30 = sbr.rel (0) target = $region21
    $region20: #{tpu_custom_call.1} parent=1 // pred_region
      %32 = dma.done [#allocation4], 256
    $region21: #{tpu_custom_call.1} parent=1 // pred_fallthru
      _
    %33 = vst [vmem:[#allocation2] sm:$0xff] 0.0
    %34 = vst [vmem:[#allocation2 + $0x8] sm:$0xff] 0.0
    %vm35 = vcmask 572416
    %36 = vst.msk [vmem:[#allocation2 + $0x10] sm:$0xff] %vm35, 0.0
    %v37 = vld [vmem:[#allocation3] sm:$0xff]
    %v38 = vmax.f32 %v37, 0.0
    %40 = vst [vmem:[#allocation1] ss:$2 sm:$0xff] %v38
    %v41 = vld.sshfl [vmem:[#allocation1] sm:$0xff pattern:$0x75316420]
    %42 = vrot.lane.b32.xlu0 %v41, 19
    %v43 = vpop.permute.xlu0 %42
    %vm45 = vcmask 281752
    %46 = vst.msk [vmem:[#allocation2] sm:$0xf] %vm45, %v43
    %47 = vst [vmem:[#allocation1] ss:$2 sm:$0xff] %v38
    %v48 = vld.sshfl [vmem:[#allocation1] sm:$0xff pattern:$0x75316420]
    %49 = vrot.lane.b32.xlu0 %v48, 21
    %v50 = vpop.permute.xlu0 %49
    %vm52 = vcmask 429352
    %53 = vst.msk [vmem:[#allocation2] sm:$0xf] %vm52, %v50
    %54 = vst [vmem:[#allocation1] ss:$2 sm:$0xff] %v38
    %v55 = vld.sshfl [vmem:[#allocation1] sm:$0xff pattern:$0x75316420]
    %56 = vrot.lane.b32.xlu0 %v55, 23
    %v57 = vpop.permute.xlu0 %56
    %vm59 = vcmask 576952
    %60 = vst.msk [vmem:[#allocation2] sm:$0xf] %vm59, %v57
    %61 = vst [vmem:[#allocation1] ss:$2 sm:$0xff] %v38
    %v62 = vld.sshfl [vmem:[#allocation1] sm:$0xff pattern:$0x75316420]
    %63 = vrot.lane.b32.xlu0 %v62, 25
    %v64 = vpop.permute.xlu0 %63
    %vm66 = vcmask 724552
    %67 = vst.msk [vmem:[#allocation2] sm:$0xf] %vm66, %v64
    %68 = vst [vmem:[#allocation1] ss:$2 sm:$0xff] %v38
    %v69 = vld.sshfl [vmem:[#allocation1] sm:$0xff pattern:$0x75316420]
    %70 = vrot.lane.b32.xlu0 %v69, 27
    %v71 = vpop.permute.xlu0 %70
    %vm73 = vcmask 872152
    %74 = vst.msk [vmem:[#allocation2] sm:$0xf] %vm73, %v71
    %75 = vst [vmem:[#allocation1] ss:$2 sm:$0xff] %v38
    %v76 = vld.sshfl [vmem:[#allocation1] sm:$0xff pattern:$0x75316420]
    %77 = vrot.lane.b32.xlu0 %v76, 29
    %v78 = vpop.permute.xlu0 %77
    %vm80 = vcmask 1019752
    %81 = vst.msk [vmem:[#allocation2] sm:$0xf] %vm80, %v78
    %82 = vst [vmem:[#allocation1] ss:$2 sm:$0xff] %v38
    %v83 = vld.sshfl [vmem:[#allocation1] sm:$0xff pattern:$0x75316420]
    %84 = vrot.lane.b32.xlu0 %v83, 31
    %v85 = vpop.permute.xlu0 %84
    %vm87 = vcmask 1044472
    %88 = vst.msk [vmem:[#allocation2] sm:$0xf] %vm87, %v85
    %vm89 = vcmask 117760
    %90 = vst.msk [vmem:[#allocation2 + $0x8] sm:$0xf] %vm89, %v85
    %91 = vst [vmem:[#allocation1] ss:$2 sm:$0xff] %v38
    %v92 = vld.sshfl [vmem:[#allocation1] sm:$0xff pattern:$0x75316420]
    %93 = vrot.lane.b32.xlu0 %v92, 33
    %v94 = vpop.permute.xlu0 %93
    %vm96 = vcmask 265352
    %97 = vst.msk [vmem:[#allocation2 + $0x8] sm:$0xf] %vm96, %v94
    %98 = vst [vmem:[#allocation1] ss:$2 sm:$0xff] %v38
    %v99 = vld.sshfl [vmem:[#allocation1 + $0x8] sm:$0xff pattern:$0x75316420]
    %100 = vrot.lane.b32.xlu0 %v99, 35
    %v101 = vpop.permute.xlu0 %100
    %vm103 = vcmask 412952
    %104 = vst.msk [vmem:[#allocation2 + $0x8] sm:$0xf] %vm103, %v101
    %105 = vst [vmem:[#allocation1] ss:$2 sm:$0xff] %v38
    %v106 = vld.sshfl [vmem:[#allocation1 + $0x8] sm:$0xff pattern:$0x75316420]
    %107 = vrot.lane.b32.xlu0 %v106, 37
    %v108 = vpop.permute.xlu0 %107
    %vm110 = vcmask 560552
    %111 = vst.msk [vmem:[#allocation2 + $0x8] sm:$0xf] %vm110, %v108
    %112 = vst [vmem:[#allocation1] ss:$2 sm:$0xff] %v38
    %v113 = vld.sshfl [vmem:[#allocation1 + $0x8] sm:$0xff pattern:$0x75316420]
    %114 = vrot.lane.b32.xlu0 %v113, 39
    %v115 = vpop.permute.xlu0 %114
    %vm117 = vcmask 708152
    %118 = vst.msk [vmem:[#allocation2 + $0x8] sm:$0xf] %vm117, %v115
    %119 = vst [vmem:[#allocation1] ss:$2 sm:$0xff] %v38
    %v120 = vld.sshfl [vmem:[#allocation1 + $0x8] sm:$0xff pattern:$0x75316420]
    %121 = vrot.lane.b32.xlu0 %v120, 41
    %v122 = vpop.permute.xlu0 %121
    %vm124 = vcmask 855752
    %125 = vst.msk [vmem:[#allocation2 + $0x8] sm:$0xf] %vm124, %v122
    %126 = vst [vmem:[#allocation1] ss:$2 sm:$0xff] %v38
    %v127 = vld.sshfl [vmem:[#allocation1 + $0x8] sm:$0xff pattern:$0x75316420]
    %128 = vrot.lane.b32.xlu0 %v127, 43
    %v129 = vpop.permute.xlu0 %128
    %vm131 = vcmask 1003352
    %132 = vst.msk [vmem:[#allocation2 + $0x8] sm:$0xf] %vm131, %v129
    %133 = vst [vmem:[#allocation1] ss:$2 sm:$0xff] %v38
    %v134 = vld.sshfl [vmem:[#allocation1 + $0x8] sm:$0xff pattern:$0x75316420]
    %135 = vrot.lane.b32.xlu0 %v134, 45
    %v136 = vpop.permute.xlu0 %135
    %vm138 = vcmask 1044456
    %139 = vst.msk [vmem:[#allocation2 + $0x8] sm:$0xf] %vm138, %v136
    %vm140 = vcmask 101376
    %141 = vst.msk [vmem:[#allocation2 + $0x10] sm:$0xf] %vm140, %v136
    %142 = vst [vmem:[#allocation1] ss:$2 sm:$0xff] %v38
    %v143 = vld.sshfl [vmem:[#allocation1 + $0x8] sm:$0xff pattern:$0x75316420]
    %144 = vrot.lane.b32.xlu0 %v143, 47
    %v145 = vpop.permute.xlu0 %144
    %vm147 = vcmask 248952
    %148 = vst.msk [vmem:[#allocation2 + $0x10] sm:$0xf] %vm147, %v145
    %149 = vst [vmem:[#allocation1] ss:$2 sm:$0xff] %v38
    %v150 = vld.sshfl [vmem:[#allocation1 + $0x8] sm:$0xff pattern:$0x75316420]
    %151 = vrot.lane.b32.xlu0 %v150, 49
    %v152 = vpop.permute.xlu0 %151
    %vm154 = vcmask 396552
    %155 = vst.msk [vmem:[#allocation2 + $0x10] sm:$0xf] %vm154, %v152
    %s156 = scalar_lea.vmem [#allocation3], 8
    %v157 = vld [vmem:[%s156] sm:$0xff]
    %v158 = vmax.f32 %v157, 0.0
    %s160 = scalar_lea.vmem [#allocation1], 1
    %161 = vst [vmem:[%s160] ss:$2 sm:$0xff] %v158
    %v162 = vld.sshfl [vmem:[#allocation1] sm:$0xff pattern:$0x75316420]
    %163 = vrot.lane.b32.xlu0 %v162, 19
    %v164 = vpop.permute.xlu0 %163
    %vm166 = vcmask 285852
    %167 = vst.msk [vmem:[#allocation2] sm:$0xf0] %vm166, %v164
    %s168 = scalar_lea.vmem [#allocation1], 1
    %169 = vst [vmem:[%s168] ss:$2 sm:$0xff] %v158
    %v170 = vld.sshfl [vmem:[#allocation1] sm:$0xff pattern:$0x75316420]
    %171 = vrot.lane.b32.xlu0 %v170, 21
    %v172 = vpop.permute.xlu0 %171
    %vm174 = vcmask 433452
    %175 = vst.msk [vmem:[#allocation2] sm:$0xf0] %vm174, %v172
    %s176 = scalar_lea.vmem [#allocation1], 1
    %177 = vst [vmem:[%s176] ss:$2 sm:$0xff] %v158
    %v178 = vld.sshfl [vmem:[#allocation1] sm:$0xff pattern:$0x75316420]
    %179 = vrot.lane.b32.xlu0 %v178, 23
    %v180 = vpop.permute.xlu0 %179
    %vm182 = vcmask 581052
    %183 = vst.msk [vmem:[#allocation2] sm:$0xf0] %vm182, %v180
    %s184 = scalar_lea.vmem [#allocation1], 1
    %185 = vst [vmem:[%s184] ss:$2 sm:$0xff] %v158
    %v186 = vld.sshfl [vmem:[#allocation1] sm:$0xff pattern:$0x75316420]
    %187 = vrot.lane.b32.xlu0 %v186, 25
    %v188 = vpop.permute.xlu0 %187
    %vm190 = vcmask 728652
    %191 = vst.msk [vmem:[#allocation2] sm:$0xf0] %vm190, %v188
    %s192 = scalar_lea.vmem [#allocation1], 1
    %193 = vst [vmem:[%s192] ss:$2 sm:$0xff] %v158
    %v194 = vld.sshfl [vmem:[#allocation1] sm:$0xff pattern:$0x75316420]
    %195 = vrot.lane.b32.xlu0 %v194, 27
    %v196 = vpop.permute.xlu0 %195
    %vm198 = vcmask 876252
    %199 = vst.msk [vmem:[#allocation2] sm:$0xf0] %vm198, %v196
    %s200 = scalar_lea.vmem [#allocation1], 1
    %201 = vst [vmem:[%s200] ss:$2 sm:$0xff] %v158
    %v202 = vld.sshfl [vmem:[#allocation1] sm:$0xff pattern:$0x75316420]
    %203 = vrot.lane.b32.xlu0 %v202, 29
    %v204 = vpop.permute.xlu0 %203
    %vm206 = vcmask 1023852
    %207 = vst.msk [vmem:[#allocation2] sm:$0xf0] %vm206, %v204
    %s208 = scalar_lea.vmem [#allocation1], 1
    %209 = vst [vmem:[%s208] ss:$2 sm:$0xff] %v158
    %v210 = vld.sshfl [vmem:[#allocation1] sm:$0xff pattern:$0x75316420]
    %211 = vrot.lane.b32.xlu0 %v210, 31
    %v212 = vpop.permute.xlu0 %211
    %vm214 = vcmask 1048572
    %215 = vst.msk [vmem:[#allocation2] sm:$0xf0] %vm214, %v212
    %vm216 = vcmask 121860
    %217 = vst.msk [vmem:[#allocation2 + $0x8] sm:$0xf0] %vm216, %v212
    %s218 = scalar_lea.vmem [#allocation1], 1
    %219 = vst [vmem:[%s218] ss:$2 sm:$0xff] %v158
    %v220 = vld.sshfl [vmem:[#allocation1] sm:$0xff pattern:$0x75316420]
    %221 = vrot.lane.b32.xlu0 %v220, 33
    %v222 = vpop.permute.xlu0 %221
    %vm224 = vcmask 269452
    %225 = vst.msk [vmem:[#allocation2 + $0x8] sm:$0xf0] %vm224, %v222
    %s226 = scalar_lea.vmem [#allocation1], 1
    %227 = vst [vmem:[%s226] ss:$2 sm:$0xff] %v158
    %v228 = vld.sshfl [vmem:[#allocation1 + $0x8] sm:$0xff pattern:$0x75316420]
    %229 = vrot.lane.b32.xlu0 %v228, 35
    %v230 = vpop.permute.xlu0 %229
    %vm232 = vcmask 417052
    %233 = vst.msk [vmem:[#allocation2 + $0x8] sm:$0xf0] %vm232, %v230
    %s234 = scalar_lea.vmem [#allocation1], 1
    %235 = vst [vmem:[%s234] ss:$2 sm:$0xff] %v158
    %v236 = vld.sshfl [vmem:[#allocation1 + $0x8] sm:$0xff pattern:$0x75316420]
    %237 = vrot.lane.b32.xlu0 %v236, 37
    %v238 = vpop.permute.xlu0 %237
    %vm240 = vcmask 564652
    %241 = vst.msk [vmem:[#allocation2 + $0x8] sm:$0xf0] %vm240, %v238
    %s242 = scalar_lea.vmem [#allocation1], 1
    %243 = vst [vmem:[%s242] ss:$2 sm:$0xff] %v158
    %v244 = vld.sshfl [vmem:[#allocation1 + $0x8] sm:$0xff pattern:$0x75316420]
    %245 = vrot.lane.b32.xlu0 %v244, 39
    %v246 = vpop.permute.xlu0 %245
    %vm248 = vcmask 712252
    %249 = vst.msk [vmem:[#allocation2 + $0x8] sm:$0xf0] %vm248, %v246
    %s250 = scalar_lea.vmem [#allocation1], 1
    %251 = vst [vmem:[%s250] ss:$2 sm:$0xff] %v158
    %v252 = vld.sshfl [vmem:[#allocation1 + $0x8] sm:$0xff pattern:$0x75316420]
    %253 = vrot.lane.b32.xlu0 %v252, 41
    %v254 = vpop.permute.xlu0 %253
    %vm256 = vcmask 859852
    %257 = vst.msk [vmem:[#allocation2 + $0x8] sm:$0xf0] %vm256, %v254
    %s258 = scalar_lea.vmem [#allocation1], 1
    %259 = vst [vmem:[%s258] ss:$2 sm:$0xff] %v158
    %v260 = vld.sshfl [vmem:[#allocation1 + $0x8] sm:$0xff pattern:$0x75316420]
    %261 = vrot.lane.b32.xlu0 %v260, 43
    %v262 = vpop.permute.xlu0 %261
    %vm264 = vcmask 1007452
    %265 = vst.msk [vmem:[#allocation2 + $0x8] sm:$0xf0] %vm264, %v262
    %s266 = scalar_lea.vmem [#allocation1], 1
    %267 = vst [vmem:[%s266] ss:$2 sm:$0xff] %v158
    %v268 = vld.sshfl [vmem:[#allocation1 + $0x8] sm:$0xff pattern:$0x75316420]
    %269 = vrot.lane.b32.xlu0 %v268, 45
    %v270 = vpop.permute.xlu0 %269
    %vm272 = vcmask 1048556
    %273 = vst.msk [vmem:[#allocation2 + $0x8] sm:$0xf0] %vm272, %v270
    %vm274 = vcmask 105476
    %275 = vst.msk [vmem:[#allocation2 + $0x10] sm:$0xf0] %vm274, %v270
    %s276 = scalar_lea.vmem [#allocation1], 1
    %277 = vst [vmem:[%s276] ss:$2 sm:$0xff] %v158
    %v278 = vld.sshfl [vmem:[#allocation1 + $0x8] sm:$0xff pattern:$0x75316420]
    %279 = vrot.lane.b32.xlu0 %v278, 47
    %v280 = vpop.permute.xlu0 %279
    %vm282 = vcmask 253052
    %283 = vst.msk [vmem:[#allocation2 + $0x10] sm:$0xf0] %vm282, %v280
    %s284 = scalar_lea.vmem [#allocation1], 1
    %285 = vst [vmem:[%s284] ss:$2 sm:$0xff] %v158
    %v286 = vld.sshfl [vmem:[#allocation1 + $0x8] sm:$0xff pattern:$0x75316420]
    %287 = vrot.lane.b32.xlu0 %v286, 49
    %v288 = vpop.permute.xlu0 %287
    %vm290 = vcmask 400652
    %291 = vst.msk [vmem:[#allocation2 + $0x10] sm:$0xf0] %vm290, %v288
    %v292 = vld [vmem:[#allocation2] sm:$0xff]
    %v293 = vld [vmem:[#allocation2 + $0x8] sm:$0xff]
    %v294 = vld [vmem:[#allocation2 + $0x10] sm:$0xff]
    %v295 = vld [vmem:[%s1] sm:$0xff]
    %v296 = vld [vmem:[%s2] sm:$0xff]
    %298 = vset.pattern.permute.xlu0 0
    %299 = vperm.xlu0 %298, %v295
    %v300 = vpop.permute.xlu0 %299
    %v302 = vmul.f32 %v292, %v300
    %v303 = vmul.f32 %v293, %v300
    %v304 = vmul.f32 %v294, %v300
    %305 = vset.pattern.permute.xlu0 1
    %306 = vperm.xlu0 %305, %v295
    %v307 = vpop.permute.xlu0 %306
    %v309 = vmul.f32 %v292, %v307
    %v310 = vmul.f32 %v293, %v307
    %v311 = vmul.f32 %v294, %v307
    %312 = vset.pattern.permute.xlu0 2
    %313 = vperm.xlu0 %312, %v295
    %v314 = vpop.permute.xlu0 %313
    %v316 = vmul.f32 %v292, %v314
    %v317 = vmul.f32 %v293, %v314
    %v318 = vmul.f32 %v294, %v314
    %319 = vset.pattern.permute.xlu0 3
    %320 = vperm.xlu0 %319, %v295
    %v321 = vpop.permute.xlu0 %320
    %v323 = vmul.f32 %v292, %v321
    %v324 = vmul.f32 %v293, %v321
    %v325 = vmul.f32 %v294, %v321
    %326 = vset.pattern.permute.xlu0 4
    %327 = vperm.xlu0 %326, %v295
    %v328 = vpop.permute.xlu0 %327
    %v330 = vmul.f32 %v292, %v328
    %v331 = vmul.f32 %v293, %v328
    %v332 = vmul.f32 %v294, %v328
    %333 = vset.pattern.permute.xlu0 5
    %334 = vperm.xlu0 %333, %v295
    %v335 = vpop.permute.xlu0 %334
    %v337 = vmul.f32 %v292, %v335
    %v338 = vmul.f32 %v293, %v335
    %v339 = vmul.f32 %v294, %v335
    %340 = vset.pattern.permute.xlu0 6
    %341 = vperm.xlu0 %340, %v295
    %v342 = vpop.permute.xlu0 %341
    %v344 = vmul.f32 %v292, %v342
    %v345 = vmul.f32 %v293, %v342
    %v346 = vmul.f32 %v294, %v342
    %347 = vset.pattern.permute.xlu0 7
    %348 = vperm.xlu0 %347, %v295
    %v349 = vpop.permute.xlu0 %348
    %v351 = vmul.f32 %v292, %v349
    %v352 = vmul.f32 %v293, %v349
    %v353 = vmul.f32 %v294, %v349
    %354 = vset.pattern.permute.xlu0 8
    %355 = vperm.xlu0 %354, %v295
    %v356 = vpop.permute.xlu0 %355
    %v358 = vmul.f32 %v292, %v356
    %v359 = vmul.f32 %v293, %v356
    %v360 = vmul.f32 %v294, %v356
    %364 = vrot.lane.b32.xlu0 %v309, 127
    %v365 = vpop.permute.xlu0 %364
    %366 = vrot.lane.b32.xlu0 %v310, 127
    %v367 = vpop.permute.xlu0 %366
    %368 = vrot.lane.b32.xlu0 %v311, 127
    %v369 = vpop.permute.xlu0 %368
    %vm370 = vcmask 1039360
    %v371 = vsel %vm370, %v365, %v367
    %v372 = vsel %vm370, %v367, %v369
    %v376 = vadd.f32 %v302, %v371
    %v377 = vadd.f32 %v303, %v372
    %v378 = vadd.f32 %v304, %v369
    %382 = vrot.lane.b32.xlu0 %v323, 112
    %v383 = vpop.permute.xlu0 %382
    %384 = vrot.lane.b32.xlu0 %v324, 112
    %v385 = vpop.permute.xlu0 %384
    %386 = vrot.lane.b32.xlu0 %v325, 112
    %v387 = vpop.permute.xlu0 %386
    %vm388 = vcmask 916480
    %v389 = vsel %vm388, %v383, %v385
    %v390 = vsel %vm388, %v385, %v387
    %v394 = vadd.f32 %v316, %v389
    %v395 = vadd.f32 %v317, %v390
    %v396 = vadd.f32 %v318, %v387
    %400 = vrot.lane.b32.xlu0 %v337, 127
    %v401 = vpop.permute.xlu0 %400
    %402 = vrot.lane.b32.xlu0 %v338, 127
    %v403 = vpop.permute.xlu0 %402
    %404 = vrot.lane.b32.xlu0 %v339, 127
    %v405 = vpop.permute.xlu0 %404
    %v406 = vsel %vm370, %v401, %v403
    %v407 = vsel %vm370, %v403, %v405
    %v411 = vadd.f32 %v330, %v406
    %v412 = vadd.f32 %v331, %v407
    %v413 = vadd.f32 %v332, %v405
    %417 = vrot.lane.b32.xlu0 %v351, 127
    %v418 = vpop.permute.xlu0 %417
    %419 = vrot.lane.b32.xlu0 %v352, 127
    %v420 = vpop.permute.xlu0 %419
    %421 = vrot.lane.b32.xlu0 %v353, 127
    %v422 = vpop.permute.xlu0 %421
    %v423 = vsel %vm370, %v418, %v420
    %v424 = vsel %vm370, %v420, %v422
    %v428 = vadd.f32 %v344, %v423
    %v429 = vadd.f32 %v345, %v424
    %v430 = vadd.f32 %v346, %v422
    %434 = vrot.lane.b32.xlu0 %v394, 126
    %v435 = vpop.permute.xlu0 %434
    %436 = vrot.lane.b32.xlu0 %v395, 126
    %v437 = vpop.permute.xlu0 %436
    %438 = vrot.lane.b32.xlu0 %v396, 126
    %v439 = vpop.permute.xlu0 %438
    %vm440 = vcmask 1031168
    %v441 = vsel %vm440, %v435, %v437
    %v442 = vsel %vm440, %v437, %v439
    %v446 = vadd.f32 %v376, %v441
    %v447 = vadd.f32 %v377, %v442
    %v448 = vadd.f32 %v378, %v439
    %452 = vrot.lane.b32.xlu0 %v428, 111
    %v453 = vpop.permute.xlu0 %452
    %454 = vrot.lane.b32.xlu0 %v429, 111
    %v455 = vpop.permute.xlu0 %454
    %456 = vrot.lane.b32.xlu0 %v430, 111
    %v457 = vpop.permute.xlu0 %456
    %vm458 = vcmask 908288
    %v459 = vsel %vm458, %v453, %v455
    %v460 = vsel %vm458, %v455, %v457
    %v464 = vadd.f32 %v411, %v459
    %v465 = vadd.f32 %v412, %v460
    %v466 = vadd.f32 %v413, %v457
    %470 = vrot.lane.b32.xlu0 %v464, 109
    %v471 = vpop.permute.xlu0 %470
    %472 = vrot.lane.b32.xlu0 %v465, 109
    %v473 = vpop.permute.xlu0 %472
    %474 = vrot.lane.b32.xlu0 %v466, 109
    %v475 = vpop.permute.xlu0 %474
    %vm476 = vcmask 891904
    %v477 = vsel %vm476, %v471, %v473
    %v478 = vsel %vm476, %v473, %v475
    %v482 = vadd.f32 %v446, %v477
    %v483 = vadd.f32 %v447, %v478
    %v484 = vadd.f32 %v448, %v475
    %488 = vrot.lane.b32.xlu0 %v358, 90
    %v489 = vpop.permute.xlu0 %488
    %490 = vrot.lane.b32.xlu0 %v359, 90
    %v491 = vpop.permute.xlu0 %490
    %492 = vrot.lane.b32.xlu0 %v360, 90
    %v493 = vpop.permute.xlu0 %492
    %vm494 = vcmask 736256
    %v495 = vsel %vm494, %v489, %v491
    %v496 = vsel %vm494, %v491, %v493
    %v500 = vadd.f32 %v482, %v495
    %v501 = vadd.f32 %v483, %v496
    %v502 = vadd.f32 %v484, %v493
    %504 = vset.pattern.permute.xlu0 0
    %505 = vperm.xlu0 %504, %v296
    %v506 = vpop.permute.xlu0 %505
    %v508 = vperm.slane %v500, 0
    %v509 = vperm.slane %v501, 0
    %v510 = vperm.slane %v502, 0
    %v511 = vmul.f32 %v506, %v508
    %v512 = vmul.f32 %v506, %v509
    %v513 = vmul.f32 %v506, %v510
    %514 = vset.pattern.permute.xlu0 1
    %515 = vperm.xlu0 %514, %v296
    %v516 = vpop.permute.xlu0 %515
    %v518 = vperm.slane %v500, 1
    %v519 = vperm.slane %v501, 1
    %v520 = vperm.slane %v502, 1
    %v521 = vmul.f32 %v516, %v518
    %v522 = vmul.f32 %v516, %v519
    %v523 = vmul.f32 %v516, %v520
    %524 = vset.pattern.permute.xlu0 2
    %525 = vperm.xlu0 %524, %v296
    %v526 = vpop.permute.xlu0 %525
    %v528 = vperm.slane %v500, 2
    %v529 = vperm.slane %v501, 2
    %v530 = vperm.slane %v502, 2
    %v531 = vmul.f32 %v526, %v528
    %v532 = vmul.f32 %v526, %v529
    %v533 = vmul.f32 %v526, %v530
    %534 = vset.pattern.permute.xlu0 3
    %535 = vperm.xlu0 %534, %v296
    %v536 = vpop.permute.xlu0 %535
    %v538 = vperm.slane %v500, 3
    %v539 = vperm.slane %v501, 3
    %v540 = vperm.slane %v502, 3
    %v541 = vmul.f32 %v536, %v538
    %v542 = vmul.f32 %v536, %v539
    %v543 = vmul.f32 %v536, %v540
    %v544 = vadd.f32 %v511, %v521
    %v545 = vadd.f32 %v512, %v522
    %v546 = vadd.f32 %v513, %v523
    %v547 = vadd.f32 %v531, %v541
    %v548 = vadd.f32 %v532, %v542
    %v549 = vadd.f32 %v533, %v543
    %v550 = vadd.f32 %v544, %v547
    %v551 = vadd.f32 %v545, %v548
    %v552 = vadd.f32 %v546, %v549
    %v553 = vperm.slane %v500, 4
    %v554 = vperm.slane %v501, 4
    %v555 = vperm.slane %v502, 4
    %v556 = vmul.f32 %v506, %v553
    %v557 = vmul.f32 %v506, %v554
    %v558 = vmul.f32 %v506, %v555
    %v559 = vperm.slane %v500, 5
    %v560 = vperm.slane %v501, 5
    %v561 = vperm.slane %v502, 5
    %v562 = vmul.f32 %v516, %v559
    %v563 = vmul.f32 %v516, %v560
    %v564 = vmul.f32 %v516, %v561
    %v565 = vperm.slane %v500, 6
    %v566 = vperm.slane %v501, 6
    %v567 = vperm.slane %v502, 6
    %v568 = vmul.f32 %v526, %v565
    %v569 = vmul.f32 %v526, %v566
    %v570 = vmul.f32 %v526, %v567
    %v571 = vperm.slane %v500, 7
    %v572 = vperm.slane %v501, 7
    %v573 = vperm.slane %v502, 7
    %v574 = vmul.f32 %v536, %v571
    %v575 = vmul.f32 %v536, %v572
    %v576 = vmul.f32 %v536, %v573
    %v577 = vadd.f32 %v556, %v562
    %v578 = vadd.f32 %v557, %v563
    %v579 = vadd.f32 %v558, %v564
    %v580 = vadd.f32 %v568, %v574
    %v581 = vadd.f32 %v569, %v575
    %v582 = vadd.f32 %v570, %v576
    %v583 = vadd.f32 %v577, %v580
    %v584 = vadd.f32 %v578, %v581
    %v585 = vadd.f32 %v579, %v582
    %v586 = vld [vmem:[%s3] sm:$0x7]
    %v588 = vperm.slane %v586, 0
    %v589 = vperm.slane %v586, 1
    %v590 = vperm.slane %v586, 2
    %v594 = vmul.f32 %v550, %v588
    %v595 = vmul.f32 %v551, %v589
    %v596 = vmul.f32 %v552, %v590
    %v597 = vadd.f32 %v594, %v595
    %vm598 = vcmask 261120
    %v599 = vsel %vm598, %v596, 0.0
    %v600 = vadd.f32 %v597, %v599
    %601 = vadd.xlane.f32.xlu0 %v600
    %v602 = vpop.xlane.xlu0 %601
    %v603 = vmul.f32 %v594, %v550
    %v604 = vmul.f32 %v595, %v551
    %v605 = vmul.f32 %v596, %v552
    %v606 = vadd.f32 %v603, %v604
    %v607 = vsel %vm598, %v605, 0.0
    %v608 = vadd.f32 %v606, %v607
    %609 = vadd.xlane.f32.xlu0 %v608
    %v610 = vpop.xlane.xlu0 %609
    %vm611 = vcmask 7168
    %v612 = vsel %vm611, %v602, %v610
    %vm613 = vcmask 15360
    %614 = vst.msk [vmem:[%s4] sm:$0xff] %vm613, %v612
    %v615 = vmul.f32 %v583, %v588
    %v616 = vmul.f32 %v584, %v589
    %v617 = vmul.f32 %v585, %v590
    %v618 = vadd.f32 %v615, %v616
    %v619 = vsel %vm598, %v617, 0.0
    %v620 = vadd.f32 %v618, %v619
    %621 = vadd.xlane.f32.xlu0 %v620
    %v622 = vpop.xlane.xlu0 %621
    %v623 = vmul.f32 %v615, %v583
    %v624 = vmul.f32 %v616, %v584
    %v625 = vmul.f32 %v617, %v585
    %v626 = vadd.f32 %v623, %v624
    %v627 = vsel %vm598, %v625, 0.0
    %v628 = vadd.f32 %v626, %v627
    %629 = vadd.xlane.f32.xlu0 %v628
    %v630 = vpop.xlane.xlu0 %629
    %v631 = vsel %vm611, %v622, %v630
    %s632 = scalar_lea.vmem %s4, 8
    %633 = vst.msk [vmem:[%s632] sm:$0xff] %vm613, %v631
    // Predicated region
    $region22: #{tpu_custom_call.1} parent=1 // pred_check
      _
    $region23: #{tpu_custom_call.1} parent=1 // pred_check_branch
      %635 = sbr.rel (0) target = $region25
    $region24: #{tpu_custom_call.1} parent=1 // pred_region
      _
    $region25: #{tpu_custom_call.1} parent=1 // pred_fallthru
      _
    // Predicated region
    $region26: #{tpu_custom_call.1} parent=1 // pred_check
      _
    $region27: #{tpu_custom_call.1} parent=1 // pred_check_branch
      %637 = sbr.rel (0) target = $region29
    $region28: #{tpu_custom_call.1} parent=1 // pred_region
      _
    $region29: #{tpu_custom_call.1} parent=1 // pred_fallthru
      _
    %638 = vsyncpa [#allocation4], 1

</llo_original>
